<compile_context>
chip_gen: v5e
topology: v5e:2x2
jax: 0.10.0
libtpu: 0.0.40
codegen_flags: <defaults>
</compile_context>

<pallas_src>
import functools

import jax
import jax.numpy as jnp
from jax import lax
from jax.experimental import pallas as pl
from jax.experimental.pallas import tpu as pltpu

_TILE_N = 512       # lane-dense tile width: multiple of 128, even (Box-Muller halves)
_TILE_M_MAX = 256   # max sublane rows per tile (multiple of 8); ~512 KiB f32 per IO tile


def _mix32(x):
    """lowbias32-style avalanche mixer on uint32 (good-enough white noise hash)."""
    x = x ^ (x >> jnp.uint32(16))
    x = x * jnp.uint32(0x21F0AAAD)
    x = x ^ (x >> jnp.uint32(15))
    x = x * jnp.uint32(0x735A2D97)
    x = x ^ (x >> jnp.uint32(15))
    return x


def _white_noise_kernel(seed_ref, x_ref, o_ref, *, std):
    tm, tn = x_ref.shape
    tn_half = tn // 2

    # ---- stateless counter-based PRNG: unique uint32 counter per element ----
    pid = pl.program_id(0).astype(jnp.uint32)
    row = lax.broadcasted_iota(jnp.int32, (tm, tn_half), 0).astype(jnp.uint32)
    col = lax.broadcasted_iota(jnp.int32, (tm, tn_half), 1).astype(jnp.uint32)
    grow = pid * jnp.uint32(tm) + row          # global row index of this tile row
    c = grow * jnp.uint32(tn) + col            # global element counter (left half)

    seed_u = seed_ref[0].astype(jnp.uint32)
    k1 = _mix32(seed_u ^ jnp.uint32(0x243F6A88))
    k2 = _mix32(seed_u ^ jnp.uint32(0x85A308D3))

    u1_bits = _mix32(c ^ k1)
    u2_bits = _mix32((c * jnp.uint32(0x9E3779B9)) ^ k2)

    # top 24 bits -> uniforms (f32 math throughout; no bf16 on the VPU/EUP path)
    inv24 = jnp.float32(1.0 / 16777216.0)
    u1 = ((u1_bits >> jnp.uint32(8)).astype(jnp.int32).astype(jnp.float32) + 1.0) * inv24  # (0, 1]
    u2 = (u2_bits >> jnp.uint32(8)).astype(jnp.int32).astype(jnp.float32) * inv24          # [0, 1)

    # ---- Box-Muller, using BOTH outputs (2 transcendentals / output element) ----
    r = jnp.sqrt(-2.0 * jnp.log(u1))
    theta = (2.0 * jnp.pi) * u2
    z1 = r * jnp.cos(theta)
    z2 = r * jnp.sin(theta)

    noise = jnp.concatenate([z1, z2], axis=-1) * jnp.float32(std)
    o_ref[...] = x_ref[...] + noise.astype(x_ref.dtype)


def white_noise(x, seed, std=0.1):
    """x: any float array (e.g. NCHW). Returns x + N(0, std^2) noise."""
    orig_shape = x.shape
    n = x.size

    # Flatten to a lane-dense 2-D slab (rows, 512), padding the tail.
    tn = _TILE_N
    rows = pl.cdiv(n, tn)
    tm = min(_TILE_M_MAX, max(8, ((rows + 7) // 8) * 8))
    rows_padded = pl.cdiv(rows, tm) * tm
    padded = rows_padded * tn

    xf = x.reshape(-1)
    if padded != n:
        xf = jnp.pad(xf, (0, padded - n))
    x2d = xf.reshape(rows_padded, tn)

    seed_arr = jnp.asarray([seed], dtype=jnp.int32)
    kernel = functools.partial(_white_noise_kernel, std=float(std))

    out2d = pl.pallas_call(
        kernel,
        out_shape=jax.ShapeDtypeStruct(x2d.shape, x2d.dtype),
        grid=(rows_padded // tm,),
        in_specs=[
            pl.BlockSpec(memory_space=pltpu.MemorySpace.SMEM),   # seed scalar
            pl.BlockSpec((tm, tn), lambda i: (i, 0)),            # x tile
        ],
        out_specs=pl.BlockSpec((tm, tn), lambda i: (i, 0)),
        compiler_params=pltpu.CompilerParams(
            dimension_semantics=("parallel",),        # megacore sharding on v7x
            vmem_limit_bytes=32 * 1024 * 1024,
        ),
    )(seed_arr, x2d)

    return out2d.reshape(-1)[:n].reshape(orig_shape)


if __name__ == "__main__":
    key = jax.random.PRNGKey(0)
    # Small NCHW input consistent with the module's elementwise forward.
    x = jax.random.normal(key, (2, 4, 16, 16), dtype=jnp.float32)

    y = white_noise(x, seed=1234, std=0.1)
    y = jax.block_until_ready(y)

    # Sanity checks: shape/dtype preserved, added noise roughly N(0, 0.1^2).
    assert y.shape == x.shape and y.dtype == x.dtype
    diff = y - x
    noise_std = float(jnp.std(diff))
    noise_mean = float(jnp.mean(diff))
    assert 0.03 < noise_std < 0.3, f"unexpected noise std {noise_std}"
    assert abs(noise_mean) < 0.05, f"unexpected noise mean {noise_mean}"

    print("KERNEL_OK")
</pallas_src>

<mosaic_0001>
module attributes {stable_mosaic.version = 11 : i64} {
  func.func @_white_noise_kernel(%arg0: i32, %arg1: memref<1xi32, #tpu.memory_space<smem>>, %arg2: memref<8x512xf32, #tpu.memory_space<vmem>>, %arg3: memref<8x512xf32, #tpu.memory_space<vmem>>) attributes {dimension_semantics = [#tpu.dimension_semantics<parallel>], iteration_bounds = array<i64: 1>, scalar_prefetch = 0 : i64, scratch_operands = 0 : i64, tpu.core_type = #tpu.core_type<tc>, window_params = [{transform_indices = @transform_0, window_bounds = array<i64: 1>}, {transform_indices = @transform_1, window_bounds = array<i64: 8, 512>}, {transform_indices = @transform_2, window_bounds = array<i64: 8, 512>}]} {
    %0 = tpu.iota {dimensions = array<i32: 0>} : vector<8x256xi32>
    %1 = tpu.iota {dimensions = array<i32: 1>} : vector<8x256xi32>
    %c8_i32 = arith.constant 8 : i32
    %2 = arith.muli %arg0, %c8_i32 : i32
    %3 = vector.broadcast %2 : i32 to vector<8x256xi32>
    %4 = arith.addi %3, %0 : vector<8x256xi32>
    %c512_i32 = arith.constant 512 : i32
    %5 = vector.broadcast %c512_i32 : i32 to vector<8x256xi32>
    %6 = arith.muli %4, %5 : vector<8x256xi32>
    %7 = arith.addi %6, %1 : vector<8x256xi32>
    %c0 = arith.constant 0 : index
    %8 = memref.load %arg1[%c0] : memref<1xi32, #tpu.memory_space<smem>>
    %c608135816_i32 = arith.constant 608135816 : i32
    %9 = arith.xori %8, %c608135816_i32 : i32
    %c16_i32 = arith.constant 16 : i32
    %10 = arith.shrui %9, %c16_i32 : i32
    %11 = arith.xori %9, %10 : i32
    %c569420461_i32 = arith.constant 569420461 : i32
    %12 = arith.muli %11, %c569420461_i32 : i32
    %c15_i32 = arith.constant 15 : i32
    %13 = arith.shrui %12, %c15_i32 : i32
    %14 = arith.xori %12, %13 : i32
    %c1935289751_i32 = arith.constant 1935289751 : i32
    %15 = arith.muli %14, %c1935289751_i32 : i32
    %c15_i32_0 = arith.constant 15 : i32
    %16 = arith.shrui %15, %c15_i32_0 : i32
    %17 = arith.xori %15, %16 : i32
    %c-2052912941_i32 = arith.constant -2052912941 : i32
    %18 = arith.xori %8, %c-2052912941_i32 : i32
    %c16_i32_1 = arith.constant 16 : i32
    %19 = arith.shrui %18, %c16_i32_1 : i32
    %20 = arith.xori %18, %19 : i32
    %c569420461_i32_2 = arith.constant 569420461 : i32
    %21 = arith.muli %20, %c569420461_i32_2 : i32
    %c15_i32_3 = arith.constant 15 : i32
    %22 = arith.shrui %21, %c15_i32_3 : i32
    %23 = arith.xori %21, %22 : i32
    %c1935289751_i32_4 = arith.constant 1935289751 : i32
    %24 = arith.muli %23, %c1935289751_i32_4 : i32
    %c15_i32_5 = arith.constant 15 : i32
    %25 = arith.shrui %24, %c15_i32_5 : i32
    %26 = arith.xori %24, %25 : i32
    %27 = vector.broadcast %17 : i32 to vector<8x256xi32>
    %28 = arith.xori %7, %27 : vector<8x256xi32>
    %c16_i32_6 = arith.constant 16 : i32
    %29 = vector.broadcast %c16_i32_6 : i32 to vector<8x256xi32>
    %30 = arith.shrui %28, %29 : vector<8x256xi32>
    %31 = arith.xori %28, %30 : vector<8x256xi32>
    %c569420461_i32_7 = arith.constant 569420461 : i32
    %32 = vector.broadcast %c569420461_i32_7 : i32 to vector<8x256xi32>
    %33 = arith.muli %31, %32 : vector<8x256xi32>
    %c15_i32_8 = arith.constant 15 : i32
    %34 = vector.broadcast %c15_i32_8 : i32 to vector<8x256xi32>
    %35 = arith.shrui %33, %34 : vector<8x256xi32>
    %36 = arith.xori %33, %35 : vector<8x256xi32>
    %c1935289751_i32_9 = arith.constant 1935289751 : i32
    %37 = vector.broadcast %c1935289751_i32_9 : i32 to vector<8x256xi32>
    %38 = arith.muli %36, %37 : vector<8x256xi32>
    %c15_i32_10 = arith.constant 15 : i32
    %39 = vector.broadcast %c15_i32_10 : i32 to vector<8x256xi32>
    %40 = arith.shrui %38, %39 : vector<8x256xi32>
    %41 = arith.xori %38, %40 : vector<8x256xi32>
    %c-1640531527_i32 = arith.constant -1640531527 : i32
    %42 = vector.broadcast %c-1640531527_i32 : i32 to vector<8x256xi32>
    %43 = arith.muli %7, %42 : vector<8x256xi32>
    %44 = vector.broadcast %26 : i32 to vector<8x256xi32>
    %45 = arith.xori %43, %44 : vector<8x256xi32>
    %c16_i32_11 = arith.constant 16 : i32
    %46 = vector.broadcast %c16_i32_11 : i32 to vector<8x256xi32>
    %47 = arith.shrui %45, %46 : vector<8x256xi32>
    %48 = arith.xori %45, %47 : vector<8x256xi32>
    %c569420461_i32_12 = arith.constant 569420461 : i32
    %49 = vector.broadcast %c569420461_i32_12 : i32 to vector<8x256xi32>
    %50 = arith.muli %48, %49 : vector<8x256xi32>
    %c15_i32_13 = arith.constant 15 : i32
    %51 = vector.broadcast %c15_i32_13 : i32 to vector<8x256xi32>
    %52 = arith.shrui %50, %51 : vector<8x256xi32>
    %53 = arith.xori %50, %52 : vector<8x256xi32>
    %c1935289751_i32_14 = arith.constant 1935289751 : i32
    %54 = vector.broadcast %c1935289751_i32_14 : i32 to vector<8x256xi32>
    %55 = arith.muli %53, %54 : vector<8x256xi32>
    %c15_i32_15 = arith.constant 15 : i32
    %56 = vector.broadcast %c15_i32_15 : i32 to vector<8x256xi32>
    %57 = arith.shrui %55, %56 : vector<8x256xi32>
    %58 = arith.xori %55, %57 : vector<8x256xi32>
    %c8_i32_16 = arith.constant 8 : i32
    %59 = vector.broadcast %c8_i32_16 : i32 to vector<8x256xi32>
    %60 = arith.shrui %41, %59 : vector<8x256xi32>
    %61 = arith.sitofp %60 : vector<8x256xi32> to vector<8x256xf32>
    %cst = arith.constant 1.000000e+00 : f32
    %62 = vector.broadcast %cst : f32 to vector<8x256xf32>
    %63 = arith.addf %61, %62 : vector<8x256xf32>
    %cst_17 = arith.constant 5.96046448E-8 : f32
    %64 = vector.broadcast %cst_17 : f32 to vector<8x256xf32>
    %65 = arith.mulf %63, %64 : vector<8x256xf32>
    %c8_i32_18 = arith.constant 8 : i32
    %66 = vector.broadcast %c8_i32_18 : i32 to vector<8x256xi32>
    %67 = arith.shrui %58, %66 : vector<8x256xi32>
    %68 = arith.sitofp %67 : vector<8x256xi32> to vector<8x256xf32>
    %cst_19 = arith.constant 5.96046448E-8 : f32
    %69 = vector.broadcast %cst_19 : f32 to vector<8x256xf32>
    %70 = arith.mulf %68, %69 : vector<8x256xf32>
    %71 = math.log %65 : vector<8x256xf32>
    %cst_20 = arith.constant -2.000000e+00 : f32
    %72 = vector.broadcast %cst_20 : f32 to vector<8x256xf32>
    %73 = arith.mulf %72, %71 : vector<8x256xf32>
    %74 = math.sqrt %73 : vector<8x256xf32>
    %cst_21 = arith.constant 6.28318548 : f32
    %75 = vector.broadcast %cst_21 : f32 to vector<8x256xf32>
    %76 = arith.mulf %75, %70 : vector<8x256xf32>
    %77 = math.cos %76 : vector<8x256xf32>
    %78 = arith.mulf %74, %77 : vector<8x256xf32>
    %79 = math.sin %76 : vector<8x256xf32>
    %80 = arith.mulf %74, %79 : vector<8x256xf32>
    %81 = tpu.concatenate %78, %80 in 1 : vector<8x256xf32>, vector<8x256xf32> -> vector<8x512xf32>
    %cst_22 = arith.constant 1.000000e-01 : f32
    %82 = vector.broadcast %cst_22 : f32 to vector<8x512xf32>
    %83 = arith.mulf %81, %82 : vector<8x512xf32>
    %c0_23 = arith.constant 0 : index
    %c0_24 = arith.constant 0 : index
    %84 = vector.load %arg2[%c0_23, %c0_24] : memref<8x512xf32, #tpu.memory_space<vmem>>, vector<8x512xf32>
    %85 = arith.addf %84, %83 : vector<8x512xf32>
    %c0_25 = arith.constant 0 : index
    %c0_26 = arith.constant 0 : index
    %86 = vector.load %arg3[%c0_25, %c0_26] : memref<8x512xf32, #tpu.memory_space<vmem>>, vector<8x512xf32>
    tpu.vector_store %arg3[%c0_25, %c0_26], %85 {strides = array<i32>} : memref<8x512xf32, #tpu.memory_space<vmem>>, vector<8x512xf32>,
    return
  }
  func.func @transform_0(%arg0: i32) -> i32 {
    %c0_i32 = arith.constant 0 : i32
    %c0_i32_0 = arith.constant 0 : i32
    return %c0_i32 : i32
  }
  func.func @transform_1(%arg0: i32) -> (i32, i32) {
    %c0_i32 = arith.constant 0 : i32
    %c0_i32_0 = arith.constant 0 : i32
    return %arg0, %c0_i32 : i32, i32
  }
  func.func @transform_2(%arg0: i32) -> (i32, i32) {
    %c0_i32 = arith.constant 0 : i32
    %c0_i32_0 = arith.constant 0 : i32
    return %arg0, %c0_i32 : i32, i32
  }
}

</mosaic_0001>

<llo_original>
// kernel: tpu_custom_call.1
$region0: #{tpu_custom_call.1}
  #allocation0 [shape = 'u32[]', space=smem, size = 0x4, offset = 0x4, fixed_abs, tag = 'smem constant byte address 0x4 - core index']
  #allocation1 [shape = 'u32[72,128]{1,0:T(1,128)}', space=vmem, size = 0x9000, scoped, tag = 'internal scratch']
  #allocation2 [shape = 's32[1]{0:T(128)S(6)}', space=smem, size = 0x200, scoped, tag = 'scoped memory for tpu_custom_call.1']
  %s0 = inlined_call_operand.<no memory space> [shape: s32[1], index: 0, kind: input, shape index: {}]
  %s1 = inlined_call_operand.hbm [shape: f32[8,512], index: 1, kind: input, shape index: {}]
  %s2 = inlined_call_operand.hbm [shape: f32[8,512], index: 2, kind: output, shape index: {}]
  %s3 = sld [smem:[#allocation0]]
  $region22: #{tpu_custom_call.1} parent=0
    _
  %s5 = ssub.s32 1, %s3
  %s6 = scalar_select 0, %s5, %s3
  %7 = sst [smem:[#allocation2]] %s0
  $region1: #{tpu_custom_call.1} parent=0
    #allocation3 [shape = 'u8[16384]{0}', space=vmem, size = 0x4000, scoped, tag = 'input window, operand 1, single buffered']
    #allocation4 [shape = 's32[1]{0}', space=sflag, size = 0x4, scoped, tag = 'scoped memory for tpu_custom_call.1']
    #allocation5 [shape = 's32[1]{0}', space=sflag, size = 0x4, scoped, tag = 'scoped memory for tpu_custom_call.1']
    #allocation6 [shape = 'u8[16384]{0}', space=vmem, size = 0x4000, scoped, tag = 'output window, operand 0, single buffered']
    %8 = vsyncpa [#allocation4], 0
    %9 = vsyncpa [#allocation5], 0
    // Predicated region
    $region2: #{tpu_custom_call.1} parent=1 // pred_check
      _
    $region3: #{tpu_custom_call.1} parent=1 // pred_check_branch
      %11 = sbr.rel (0) target = $region5
    $region4: #{tpu_custom_call.1} parent=1 // pred_region
      _
    $region5: #{tpu_custom_call.1} parent=1 // pred_fallthru
      _
    // Predicated region
    $region6: #{tpu_custom_call.1} parent=1 // pred_check
      _
    $region7: #{tpu_custom_call.1} parent=1 // pred_check_branch
      %13 = sbr.rel (0) target = $region9
    $region8: #{tpu_custom_call.1} parent=1 // pred_region
      %15 = vsyncadd [#allocation4], 0
      %s17 = sshll.u32 %s1, 4
      %s18 = int_to_ptr.hbm [resolvable:$true] %s17
      %s19 = sshll.u32 [#allocation3], 4
      %s20 = int_to_ptr.vmem [resolvable:$true] %s19
      %22 = dma.hbm_to_vmem [thread:$0]  %s18, 512, %s20, [#allocation4]
    $region9: #{tpu_custom_call.1} parent=1 // pred_fallthru
      _
    // Predicated region
    $region10: #{tpu_custom_call.1} parent=1 // pred_check
      _
    $region11: #{tpu_custom_call.1} parent=1 // pred_check_branch
      %24 = sbr.rel (0) target = $region13
    $region12: #{tpu_custom_call.1} parent=1 // pred_region
      %26 = dma.done [#allocation4], 512
    $region13: #{tpu_custom_call.1} parent=1 // pred_fallthru
      _
    %v27 = vlaneseq
    %v28 = vshrl.u32 %v27, 7
    %v29 = vlaneseq
    %v30 = vand.u32 %v29, 127
    %v31 = vadd.s32 %v30, 128
    %s32 = smul.u32 0, 8
    %v33 = vstv %s32
    %v34 = vadd.s32 %v33, %v28
    %v35 = vmul.u32 %v34, 512
    %v36 = vadd.s32 %v35, %v30
    %v37 = vadd.s32 %v35, %v31
    %s38 = sld [smem:[#allocation2]]
    %s39 = sxor.u32 %s38, 608135816
    %s40 = sshrl.u32 %s39, 16
    %s41 = sxor.u32 %s39, %s40
    %s42 = smul.u32 %s41, 569420461
    %s43 = sshrl.u32 %s42, 15
    %s44 = sxor.u32 %s42, %s43
    %s45 = smul.u32 %s44, 1935289751
    %s46 = sshrl.u32 %s45, 15
    %s47 = sxor.u32 %s45, %s46
    %s48 = sxor.u32 %s38, 2242054355
    %s49 = sshrl.u32 %s48, 16
    %s50 = sxor.u32 %s48, %s49
    %s51 = smul.u32 %s50, 569420461
    %s52 = sshrl.u32 %s51, 15
    %s53 = sxor.u32 %s51, %s52
    %s54 = smul.u32 %s53, 1935289751
    %s55 = sshrl.u32 %s54, 15
    %s56 = sxor.u32 %s54, %s55
    %v57 = vstv %s47
    %v58 = vxor.u32 %v36, %v57
    %v59 = vxor.u32 %v37, %v57
    %v60 = vshrl.u32 %v58, 16
    %v61 = vshrl.u32 %v59, 16
    %v62 = vxor.u32 %v58, %v60
    %v63 = vxor.u32 %v59, %v61
    %v64 = vmul.u32 %v62, 569420461
    %v65 = vmul.u32 %v63, 569420461
    %v66 = vshrl.u32 %v64, 15
    %v67 = vshrl.u32 %v65, 15
    %v68 = vxor.u32 %v64, %v66
    %v69 = vxor.u32 %v65, %v67
    %v70 = vmul.u32 %v68, 1935289751
    %v71 = vmul.u32 %v69, 1935289751
    %v72 = vshrl.u32 %v70, 15
    %v73 = vshrl.u32 %v71, 15
    %v74 = vxor.u32 %v70, %v72
    %v75 = vxor.u32 %v71, %v73
    %v76 = vmul.u32 %v36, 2654435769
    %v77 = vmul.u32 %v37, 2654435769
    %v78 = vstv %s56
    %v79 = vxor.u32 %v76, %v78
    %v80 = vxor.u32 %v77, %v78
    %v81 = vshrl.u32 %v79, 16
    %v82 = vshrl.u32 %v80, 16
    %v83 = vxor.u32 %v79, %v81
    %v84 = vxor.u32 %v80, %v82
    %v85 = vmul.u32 %v83, 569420461
    %v86 = vmul.u32 %v84, 569420461
    %v87 = vshrl.u32 %v85, 15
    %v88 = vshrl.u32 %v86, 15
    %v89 = vxor.u32 %v85, %v87
    %v90 = vxor.u32 %v86, %v88
    %v91 = vmul.u32 %v89, 1935289751
    %v92 = vmul.u32 %v90, 1935289751
    %v93 = vshrl.u32 %v91, 15
    %v94 = vshrl.u32 %v92, 15
    %v95 = vxor.u32 %v91, %v93
    %v96 = vxor.u32 %v92, %v94
    %v97 = vshrl.u32 %v74, 8
    %v98 = vshrl.u32 %v75, 8
    %v99 = vcvt.s32.f32 %v97
    %v100 = vcvt.s32.f32 %v98
    %v101 = vadd.f32 %v99, 1.0
    %v102 = vadd.f32 %v100, 1.0
    %v103 = vmul.f32 %v101, 5.9604645e-08
    %v104 = vmul.f32 %v102, 5.9604645e-08
    %v105 = vshrl.u32 %v95, 8
    %v106 = vshrl.u32 %v96, 8
    %v107 = vcvt.s32.f32 %v105
    %v108 = vcvt.s32.f32 %v106
    %v109 = vmul.f32 %v107, 5.9604645e-08
    %v110 = vmul.f32 %v108, 5.9604645e-08
    %v111 = vlog2.pop %v103
    %v112 = vmul.f32 %v111, 0.6931472
    %v113 = vlog2.pop %v104
    %v114 = vmul.f32 %v113, 0.6931472
    %v115 = vmul.f32 %v112, -2.0
    %v116 = vmul.f32 %v114, -2.0
    %v117 = vrsqrt.pop %v115
    %v118 = vmul.f32 %v117, %v115
    %v119 = vmul.f32 %v118, %v117
    %v120 = vmul.f32 0.5, %v119
    %v121 = vsub.f32 1.5, %v120
    %v122 = vmul.f32 %v117, %v121
    %v123 = vmul.f32 %v115, %v122
    %vm124 = vcmp.eq.f32.partialorder %v115, inf
    %v125 = vsel %vm124, %v115, %v123
    %vm126 = vcmp.eq.f32.partialorder %v115, 0.0
    %v127 = vand.u32 %v115, 2147483648
    %v128 = vsel %vm126, %v127, %v125
    %v129 = vrsqrt.pop %v116
    %v130 = vmul.f32 %v129, %v116
    %v131 = vmul.f32 %v130, %v129
    %v132 = vmul.f32 0.5, %v131
    %v133 = vsub.f32 1.5, %v132
    %v134 = vmul.f32 %v129, %v133
    %v135 = vmul.f32 %v116, %v134
    %vm136 = vcmp.eq.f32.partialorder %v116, inf
    %v137 = vsel %vm136, %v116, %v135
    %vm138 = vcmp.eq.f32.partialorder %v116, 0.0
    %v139 = vand.u32 %v116, 2147483648
    %v140 = vsel %vm138, %v139, %v137
    %v141 = vmul.f32 %v109, 6.2831855
    %v142 = vmul.f32 %v110, 6.2831855
    %v143 = vand.u32 2147483647, %v141
    %vm144 = vcmp.le.f32.partialorder %v143, 0.7853982
    %vm145 = vcmp.lt.s32.totalorder %v141, 0
    %v146 = vand.u32 %v141, 2139095040
    %v147 = vshrl.u32 %v146, 23
    %v148 = vsub.s32 %v147, 127
    %v149 = vand.u32 2147483647, %v141
    %v150 = vand.u32 %v149, 8388607
    %v151 = vor.u32 %v150, 8388608
    %v152 = vsub.s32 0, %v151
    %v153 = vadd.s32 %v148, 1
    %vm154 = vcmp.gt.s32.totalorder %v153, 0
    %v155 = vsel %vm154, %v153, 0
    %v156 = vshrl.u32 %v155, 5
    %v157 = vand.u32 %v155, 31
    %v158 = vsub.s32 32, %v157
    %v159 = vshrl.u32 683565275, %v158
    %v160 = vshll.u32 683565275, %v157
    %v161 = vshrl.u32 2475754826, %v158
    %v162 = vor.u32 %v160, %v161
    %v163 = vshll.u32 2475754826, %v157
    %v164 = vshrl.u32 2131351028, %v158
    %v165 = vor.u32 %v163, %v164
    %v166 = vshll.u32 2131351028, %v157
    %v167 = vshrl.u32 2102212464, %v158
    %v168 = vor.u32 %v166, %v167
    %v169 = vshll.u32 2102212464, %v157
    %v170 = vshrl.u32 920167782, %v158
    %v171 = vor.u32 %v169, %v170
    %v172 = vshll.u32 920167782, %v157
    %v173 = vshrl.u32 1326507024, %v158
    %v174 = vor.u32 %v172, %v173
    %vm175 = vcmp.lt.s32.totalorder %v156, 1
    %vm176 = vcmp.lt.s32.totalorder %v156, 2
    %vm177 = vcmp.lt.s32.totalorder %v156, 3
    %vm178 = vcmp.lt.s32.totalorder %v156, 4
    %v179 = vsel %vm175, %v159, %v162
    %v180 = vsel %vm178, %v168, 2102212464
    %v181 = vsel %vm177, %v165, %v180
    %v182 = vsel %vm176, %v179, %v181
    %v183 = vsel %vm175, %v162, %v165
    %v184 = vsel %vm178, %v171, 920167782
    %v185 = vsel %vm177, %v168, %v184
    %v186 = vsel %vm176, %v183, %v185
    %v187 = vsel %vm175, %v165, %v168
    %v188 = vsel %vm178, %v174, 1326507024
    %v189 = vsel %vm177, %v171, %v188
    %v190 = vsel %vm176, %v187, %v189
    %v191 = vshll.u32 %v151, 8
    %v192 = vand.u32 %v191, 65535
    %v193 = vshrl.u32 %v191, 16
    %v194 = vand.u32 %v190, 65535
    %v195 = vshrl.u32 %v190, 16
    %v196 = vmul.u32 %v192, %v194
    %v197 = vmul.u32 %v192, %v195
    %v198 = vmul.u32 %v193, %v194
    %v199 = vmul.u32 %v193, %v195
    %v200 = vshll.u32 %v197, 16
    %v201 = vshrl.u32 %v197, 16
    %v202 = vshll.u32 %v198, 16
    %v203 = vshrl.u32 %v198, 16
    %vm204 = vc.u32 %v196, %v200
    %v205 = vsel %vm204, 1, 0
    %v206 = vadd.s32 %v196, %v200
    %v207 = vadd.s32 %v199, %v205
    %vm208 = vc.u32 %v206, %v202
    %v209 = vsel %vm208, 1, 0
    %v210 = vadd.s32 %v206, %v202
    %v211 = vadd.s32 %v207, %v209
    %v212 = vadd.s32 %v211, %v201
    %v213 = vadd.s32 %v212, %v203
    %v214 = vand.u32 %v191, 65535
    %v215 = vshrl.u32 %v191, 16
    %v216 = vand.u32 %v186, 65535
    %v217 = vshrl.u32 %v186, 16
    %v218 = vmul.u32 %v214, %v216
    %v219 = vmul.u32 %v214, %v217
    %v220 = vmul.u32 %v215, %v216
    %v221 = vmul.u32 %v215, %v217
    %v222 = vshll.u32 %v219, 16
    %v223 = vshrl.u32 %v219, 16
    %v224 = vshll.u32 %v220, 16
    %v225 = vshrl.u32 %v220, 16
    %vm226 = vc.u32 %v218, %v222
    %v227 = vsel %vm226, 1, 0
    %v228 = vadd.s32 %v218, %v222
    %v229 = vadd.s32 %v221, %v227
    %vm230 = vc.u32 %v228, %v224
    %v231 = vsel %vm230, 1, 0
    %v232 = vadd.s32 %v228, %v224
    %v233 = vadd.s32 %v229, %v231
    %v234 = vadd.s32 %v233, %v223
    %v235 = vadd.s32 %v234, %v225
    %v236 = vmul.u32 %v191, %v182
    %v237 = vadd.s32 %v213, %v232
    %vm238 = vc.u32 %v213, %v232
    %v239 = vadd.s32 %v235, 1
    %v240 = vsel %vm238, %v239, %v235
    %v241 = vadd.s32 %v236, %v240
    %v242 = vadd.s32 %v241, 536870912
    %v243 = vshrl.u32 %v242, 30
    %v244 = vshll.u32 %v243, 30
    %v245 = vsub.s32 %v241, %v244
    %vm246 = vcmp.lt.s32.totalorder %v245, 0
    %v247 = vsub.s32 0, %v245
    %v248 = vsel %vm246, %v247, %v245
    %v249 = vclz %v248
    %v250 = vsub.s32 %v249, 2
    %vm251 = vcmp.gt.s32.totalorder 0, %v250
    %v252 = vsel %vm251, 0, %v250
    %v253 = vsub.s32 32, %v252
    %v254 = vshll.u32 %v245, %v252
    %v255 = vshrl.u32 %v237, %v253
    %v256 = vor.u32 %v254, %v255
    %v257 = vsub.s32 4294967266, %v252
    %v258 = vadd.s32 %v257, 127
    %v259 = vshll.u32 %v258, 23
    %v260 = vor.u32 4788187, %v259
    %v261 = vand.u32 2147483647, %v260
    %v263 = vcvt.s32.f32 %v256
    %v264 = vmul.f32 %v263, %v261
    %v265 = vxor.u32 %v264, 2147483648
    %v266 = vsel %vm145, %v265, %v264
    %v267 = vsub.s32 4, %v243
    %v268 = vsel %vm145, %v267, %v243
    %v269 = vsel %vm144, %v141, %v266
    %v270 = vsel %vm144, 0, %v268
    %v271 = vmul.f32 %v269, %v269
    %v272 = vmul.f32 %v271, -0.001358992
    %v273 = vadd.f32 %v272, 0.041655596
    %v274 = vmul.f32 %v271, %v273
    %v275 = vadd.f32 %v274, -0.4999988
    %v276 = vmul.f32 %v271, %v275
    %v277 = vadd.f32 1.0, %v276
    %v278 = vmul.f32 %v269, %v269
    %v279 = vmul.f32 %v278, -0.00019511016
    %v280 = vadd.f32 %v279, 0.008332121
    %v281 = vmul.f32 %v278, %v280
    %v282 = vadd.f32 %v281, -0.16666654
    %v283 = vmul.f32 %v278, %v282
    %v284 = vadd.f32 %v283, 1.0
    %v285 = vmul.f32 %v284, %v269
    %vm286 = vweird.f32 %v141
    %v287 = vand.u32 %v270, 3
    %vm288 = vcmp.lt.s32.totalorder %v287, 2
    %vm289 = vcmp.eq.s32.totalorder %v287, 0
    %v290 = vxor.u32 %v285, 2147483648
    %v291 = vsel %vm289, %v277, %v290
    %vm292 = vcmp.eq.s32.totalorder %v287, 2
    %v293 = vxor.u32 %v277, 2147483648
    %v294 = vsel %vm292, %v293, %v285
    %v295 = vsel %vm288, %v291, %v294
    %v296 = vsel %vm286, nan, %v295
    %v297 = vand.u32 2147483647, %v142
    %vm298 = vcmp.le.f32.partialorder %v297, 0.7853982
    %vm299 = vcmp.lt.s32.totalorder %v142, 0
    %v300 = vand.u32 %v142, 2139095040
    %v301 = vshrl.u32 %v300, 23
    %v302 = vsub.s32 %v301, 127
    %v303 = vand.u32 2147483647, %v142
    %v304 = vand.u32 %v303, 8388607
    %v305 = vor.u32 %v304, 8388608
    %v306 = vsub.s32 0, %v305
    %v307 = vadd.s32 %v302, 1
    %vm308 = vcmp.gt.s32.totalorder %v307, 0
    %v309 = vsel %vm308, %v307, 0
    %v310 = vshrl.u32 %v309, 5
    %v311 = vand.u32 %v309, 31
    %v312 = vsub.s32 32, %v311
    %v313 = vshrl.u32 683565275, %v312
    %v314 = vshll.u32 683565275, %v311
    %v315 = vshrl.u32 2475754826, %v312
    %v316 = vor.u32 %v314, %v315
    %v317 = vshll.u32 2475754826, %v311
    %v318 = vshrl.u32 2131351028, %v312
    %v319 = vor.u32 %v317, %v318
    %v320 = vshll.u32 2131351028, %v311
    %v321 = vshrl.u32 2102212464, %v312
    %v322 = vor.u32 %v320, %v321
    %v323 = vshll.u32 2102212464, %v311
    %v324 = vshrl.u32 920167782, %v312
    %v325 = vor.u32 %v323, %v324
    %v326 = vshll.u32 920167782, %v311
    %v327 = vshrl.u32 1326507024, %v312
    %v328 = vor.u32 %v326, %v327
    %vm329 = vcmp.lt.s32.totalorder %v310, 1
    %vm330 = vcmp.lt.s32.totalorder %v310, 2
    %vm331 = vcmp.lt.s32.totalorder %v310, 3
    %vm332 = vcmp.lt.s32.totalorder %v310, 4
    %v333 = vsel %vm329, %v313, %v316
    %v334 = vsel %vm332, %v322, 2102212464
    %v335 = vsel %vm331, %v319, %v334
    %v336 = vsel %vm330, %v333, %v335
    %v337 = vsel %vm329, %v316, %v319
    %v338 = vsel %vm332, %v325, 920167782
    %v339 = vsel %vm331, %v322, %v338
    %v340 = vsel %vm330, %v337, %v339
    %v341 = vsel %vm329, %v319, %v322
    %v342 = vsel %vm332, %v328, 1326507024
    %v343 = vsel %vm331, %v325, %v342
    %v344 = vsel %vm330, %v341, %v343
    %v345 = vshll.u32 %v305, 8
    %v346 = vand.u32 %v345, 65535
    %v347 = vshrl.u32 %v345, 16
    %v348 = vand.u32 %v344, 65535
    %v349 = vshrl.u32 %v344, 16
    %v350 = vmul.u32 %v346, %v348
    %v351 = vmul.u32 %v346, %v349
    %v352 = vmul.u32 %v347, %v348
    %v353 = vmul.u32 %v347, %v349
    %v354 = vshll.u32 %v351, 16
    %v355 = vshrl.u32 %v351, 16
    %v356 = vshll.u32 %v352, 16
    %v357 = vshrl.u32 %v352, 16
    %vm358 = vc.u32 %v350, %v354
    %v359 = vsel %vm358, 1, 0
    %v360 = vadd.s32 %v350, %v354
    %v361 = vadd.s32 %v353, %v359
    %vm362 = vc.u32 %v360, %v356
    %v363 = vsel %vm362, 1, 0
    %v364 = vadd.s32 %v360, %v356
    %v365 = vadd.s32 %v361, %v363
    %v366 = vadd.s32 %v365, %v355
    %v367 = vadd.s32 %v366, %v357
    %v368 = vand.u32 %v345, 65535
    %v369 = vshrl.u32 %v345, 16
    %v370 = vand.u32 %v340, 65535
    %v371 = vshrl.u32 %v340, 16
    %v372 = vmul.u32 %v368, %v370
    %v373 = vmul.u32 %v368, %v371
    %v374 = vmul.u32 %v369, %v370
    %v375 = vmul.u32 %v369, %v371
    %v376 = vshll.u32 %v373, 16
    %v377 = vshrl.u32 %v373, 16
    %v378 = vshll.u32 %v374, 16
    %v379 = vshrl.u32 %v374, 16
    %vm380 = vc.u32 %v372, %v376
    %v381 = vsel %vm380, 1, 0
    %v382 = vadd.s32 %v372, %v376
    %v383 = vadd.s32 %v375, %v381
    %vm384 = vc.u32 %v382, %v378
    %v385 = vsel %vm384, 1, 0
    %v386 = vadd.s32 %v382, %v378
    %v387 = vadd.s32 %v383, %v385
    %v388 = vadd.s32 %v387, %v377
    %v389 = vadd.s32 %v388, %v379
    %v390 = vmul.u32 %v345, %v336
    %v391 = vadd.s32 %v367, %v386
    %vm392 = vc.u32 %v367, %v386
    %v393 = vadd.s32 %v389, 1
    %v394 = vsel %vm392, %v393, %v389
    %v395 = vadd.s32 %v390, %v394
    %v396 = vadd.s32 %v395, 536870912
    %v397 = vshrl.u32 %v396, 30
    %v398 = vshll.u32 %v397, 30
    %v399 = vsub.s32 %v395, %v398
    %vm400 = vcmp.lt.s32.totalorder %v399, 0
    %v401 = vsub.s32 0, %v399
    %v402 = vsel %vm400, %v401, %v399
    %v403 = vclz %v402
    %v404 = vsub.s32 %v403, 2
    %vm405 = vcmp.gt.s32.totalorder 0, %v404
    %v406 = vsel %vm405, 0, %v404
    %v407 = vsub.s32 32, %v406
    %v408 = vshll.u32 %v399, %v406
    %v409 = vshrl.u32 %v391, %v407
    %v410 = vor.u32 %v408, %v409
    %v411 = vsub.s32 4294967266, %v406
    %v412 = vadd.s32 %v411, 127
    %v413 = vshll.u32 %v412, 23
    %v414 = vor.u32 4788187, %v413
    %v415 = vand.u32 2147483647, %v414
    %v417 = vcvt.s32.f32 %v410
    %v418 = vmul.f32 %v417, %v415
    %v419 = vxor.u32 %v418, 2147483648
    %v420 = vsel %vm299, %v419, %v418
    %v421 = vsub.s32 4, %v397
    %v422 = vsel %vm299, %v421, %v397
    %v423 = vsel %vm298, %v142, %v420
    %v424 = vsel %vm298, 0, %v422
    %v425 = vmul.f32 %v423, %v423
    %v426 = vmul.f32 %v425, -0.001358992
    %v427 = vadd.f32 %v426, 0.041655596
    %v428 = vmul.f32 %v425, %v427
    %v429 = vadd.f32 %v428, -0.4999988
    %v430 = vmul.f32 %v425, %v429
    %v431 = vadd.f32 1.0, %v430
    %v432 = vmul.f32 %v423, %v423
    %v433 = vmul.f32 %v432, -0.00019511016
    %v434 = vadd.f32 %v433, 0.008332121
    %v435 = vmul.f32 %v432, %v434
    %v436 = vadd.f32 %v435, -0.16666654
    %v437 = vmul.f32 %v432, %v436
    %v438 = vadd.f32 %v437, 1.0
    %v439 = vmul.f32 %v438, %v423
    %vm440 = vweird.f32 %v142
    %v441 = vand.u32 %v424, 3
    %vm442 = vcmp.lt.s32.totalorder %v441, 2
    %vm443 = vcmp.eq.s32.totalorder %v441, 0
    %v444 = vxor.u32 %v439, 2147483648
    %v445 = vsel %vm443, %v431, %v444
    %vm446 = vcmp.eq.s32.totalorder %v441, 2
    %v447 = vxor.u32 %v431, 2147483648
    %v448 = vsel %vm446, %v447, %v439
    %v449 = vsel %vm442, %v445, %v448
    %v450 = vsel %vm440, nan, %v449
    %v451 = vmul.f32 %v128, %v296
    %v452 = vmul.f32 %v140, %v450
    %v453 = vand.u32 2147483647, %v141
    %vm454 = vcmp.le.f32.partialorder %v453, 0.7853982
    %vm455 = vcmp.lt.s32.totalorder %v141, 0
    %v456 = vand.u32 %v141, 2139095040
    %v457 = vshrl.u32 %v456, 23
    %v458 = vsub.s32 %v457, 127
    %v459 = vand.u32 2147483647, %v141
    %v460 = vand.u32 %v459, 8388607
    %v461 = vor.u32 %v460, 8388608
    %v462 = vsub.s32 0, %v461
    %v463 = vadd.s32 %v458, 1
    %vm464 = vcmp.gt.s32.totalorder %v463, 0
    %v465 = vsel %vm464, %v463, 0
    %v466 = vshrl.u32 %v465, 5
    %v467 = vand.u32 %v465, 31
    %v468 = vsub.s32 32, %v467
    %v469 = vshrl.u32 683565275, %v468
    %v470 = vshll.u32 683565275, %v467
    %v471 = vshrl.u32 2475754826, %v468
    %v472 = vor.u32 %v470, %v471
    %v473 = vshll.u32 2475754826, %v467
    %v474 = vshrl.u32 2131351028, %v468
    %v475 = vor.u32 %v473, %v474
    %v476 = vshll.u32 2131351028, %v467
    %v477 = vshrl.u32 2102212464, %v468
    %v478 = vor.u32 %v476, %v477
    %v479 = vshll.u32 2102212464, %v467
    %v480 = vshrl.u32 920167782, %v468
    %v481 = vor.u32 %v479, %v480
    %v482 = vshll.u32 920167782, %v467
    %v483 = vshrl.u32 1326507024, %v468
    %v484 = vor.u32 %v482, %v483
    %vm485 = vcmp.lt.s32.totalorder %v466, 1
    %vm486 = vcmp.lt.s32.totalorder %v466, 2
    %vm487 = vcmp.lt.s32.totalorder %v466, 3
    %vm488 = vcmp.lt.s32.totalorder %v466, 4
    %v489 = vsel %vm485, %v469, %v472
    %v490 = vsel %vm488, %v478, 2102212464
    %v491 = vsel %vm487, %v475, %v490
    %v492 = vsel %vm486, %v489, %v491
    %v493 = vsel %vm485, %v472, %v475
    %v494 = vsel %vm488, %v481, 920167782
    %v495 = vsel %vm487, %v478, %v494
    %v496 = vsel %vm486, %v493, %v495
    %v497 = vsel %vm485, %v475, %v478
    %v498 = vsel %vm488, %v484, 1326507024
    %v499 = vsel %vm487, %v481, %v498
    %v500 = vsel %vm486, %v497, %v499
    %v501 = vshll.u32 %v461, 8
    %v502 = vand.u32 %v501, 65535
    %v503 = vshrl.u32 %v501, 16
    %v504 = vand.u32 %v500, 65535
    %v505 = vshrl.u32 %v500, 16
    %v506 = vmul.u32 %v502, %v504
    %v507 = vmul.u32 %v502, %v505
    %v508 = vmul.u32 %v503, %v504
    %v509 = vmul.u32 %v503, %v505
    %v510 = vshll.u32 %v507, 16
    %v511 = vshrl.u32 %v507, 16
    %v512 = vshll.u32 %v508, 16
    %v513 = vshrl.u32 %v508, 16
    %vm514 = vc.u32 %v506, %v510
    %v515 = vsel %vm514, 1, 0
    %v516 = vadd.s32 %v506, %v510
    %v517 = vadd.s32 %v509, %v515
    %vm518 = vc.u32 %v516, %v512
    %v519 = vsel %vm518, 1, 0
    %v520 = vadd.s32 %v516, %v512
    %v521 = vadd.s32 %v517, %v519
    %v522 = vadd.s32 %v521, %v511
    %v523 = vadd.s32 %v522, %v513
    %v524 = vand.u32 %v501, 65535
    %v525 = vshrl.u32 %v501, 16
    %v526 = vand.u32 %v496, 65535
    %v527 = vshrl.u32 %v496, 16
    %v528 = vmul.u32 %v524, %v526
    %v529 = vmul.u32 %v524, %v527
    %v530 = vmul.u32 %v525, %v526
    %v531 = vmul.u32 %v525, %v527
    %v532 = vshll.u32 %v529, 16
    %v533 = vshrl.u32 %v529, 16
    %v534 = vshll.u32 %v530, 16
    %v535 = vshrl.u32 %v530, 16
    %vm536 = vc.u32 %v528, %v532
    %v537 = vsel %vm536, 1, 0
    %v538 = vadd.s32 %v528, %v532
    %v539 = vadd.s32 %v531, %v537
    %vm540 = vc.u32 %v538, %v534
    %v541 = vsel %vm540, 1, 0
    %v542 = vadd.s32 %v538, %v534
    %v543 = vadd.s32 %v539, %v541
    %v544 = vadd.s32 %v543, %v533
    %v545 = vadd.s32 %v544, %v535
    %v546 = vmul.u32 %v501, %v492
    %v547 = vadd.s32 %v523, %v542
    %vm548 = vc.u32 %v523, %v542
    %v549 = vadd.s32 %v545, 1
    %v550 = vsel %vm548, %v549, %v545
    %v551 = vadd.s32 %v546, %v550
    %v552 = vadd.s32 %v551, 536870912
    %v553 = vshrl.u32 %v552, 30
    %v554 = vshll.u32 %v553, 30
    %v555 = vsub.s32 %v551, %v554
    %vm556 = vcmp.lt.s32.totalorder %v555, 0
    %v557 = vsub.s32 0, %v555
    %v558 = vsel %vm556, %v557, %v555
    %v559 = vclz %v558
    %v560 = vsub.s32 %v559, 2
    %vm561 = vcmp.gt.s32.totalorder 0, %v560
    %v562 = vsel %vm561, 0, %v560
    %v563 = vsub.s32 32, %v562
    %v564 = vshll.u32 %v555, %v562
    %v565 = vshrl.u32 %v547, %v563
    %v566 = vor.u32 %v564, %v565
    %v567 = vsub.s32 4294967266, %v562
    %v568 = vadd.s32 %v567, 127
    %v569 = vshll.u32 %v568, 23
    %v570 = vor.u32 4788187, %v569
    %v571 = vand.u32 2147483647, %v570
    %v573 = vcvt.s32.f32 %v566
    %v574 = vmul.f32 %v573, %v571
    %v575 = vxor.u32 %v574, 2147483648
    %v576 = vsel %vm455, %v575, %v574
    %v577 = vsub.s32 4, %v553
    %v578 = vsel %vm455, %v577, %v553
    %v579 = vsel %vm454, %v141, %v576
    %v580 = vsel %vm454, 0, %v578
    %v581 = vmul.f32 %v579, %v579
    %v582 = vmul.f32 %v581, -0.001358992
    %v583 = vadd.f32 %v582, 0.041655596
    %v584 = vmul.f32 %v581, %v583
    %v585 = vadd.f32 %v584, -0.4999988
    %v586 = vmul.f32 %v581, %v585
    %v587 = vadd.f32 1.0, %v586
    %v588 = vmul.f32 %v579, %v579
    %v589 = vmul.f32 %v588, -0.00019511016
    %v590 = vadd.f32 %v589, 0.008332121
    %v591 = vmul.f32 %v588, %v590
    %v592 = vadd.f32 %v591, -0.16666654
    %v593 = vmul.f32 %v588, %v592
    %v594 = vadd.f32 %v593, 1.0
    %v595 = vmul.f32 %v594, %v579
    %vm596 = vweird.f32 %v141
    %v597 = vadd.s32 %v580, 3
    %v598 = vand.u32 %v597, 3
    %vm599 = vcmp.lt.s32.totalorder %v598, 2
    %vm600 = vcmp.eq.s32.totalorder %v598, 0
    %v601 = vxor.u32 %v595, 2147483648
    %v602 = vsel %vm600, %v587, %v601
    %vm603 = vcmp.eq.s32.totalorder %v598, 2
    %v604 = vxor.u32 %v587, 2147483648
    %v605 = vsel %vm603, %v604, %v595
    %v606 = vsel %vm599, %v602, %v605
    %v607 = vsel %vm596, nan, %v606
    %v608 = vand.u32 2147483647, %v142
    %vm609 = vcmp.le.f32.partialorder %v608, 0.7853982
    %vm610 = vcmp.lt.s32.totalorder %v142, 0
    %v611 = vand.u32 %v142, 2139095040
    %v612 = vshrl.u32 %v611, 23
    %v613 = vsub.s32 %v612, 127
    %v614 = vand.u32 2147483647, %v142
    %v615 = vand.u32 %v614, 8388607
    %v616 = vor.u32 %v615, 8388608
    %v617 = vsub.s32 0, %v616
    %v618 = vadd.s32 %v613, 1
    %vm619 = vcmp.gt.s32.totalorder %v618, 0
    %v620 = vsel %vm619, %v618, 0
    %v621 = vshrl.u32 %v620, 5
    %v622 = vand.u32 %v620, 31
    %v623 = vsub.s32 32, %v622
    %v624 = vshrl.u32 683565275, %v623
    %v625 = vshll.u32 683565275, %v622
    %v626 = vshrl.u32 2475754826, %v623
    %v627 = vor.u32 %v625, %v626
    %v628 = vshll.u32 2475754826, %v622
    %v629 = vshrl.u32 2131351028, %v623
    %v630 = vor.u32 %v628, %v629
    %v631 = vshll.u32 2131351028, %v622
    %v632 = vshrl.u32 2102212464, %v623
    %v633 = vor.u32 %v631, %v632
    %v634 = vshll.u32 2102212464, %v622
    %v635 = vshrl.u32 920167782, %v623
    %v636 = vor.u32 %v634, %v635
    %v637 = vshll.u32 920167782, %v622
    %v638 = vshrl.u32 1326507024, %v623
    %v639 = vor.u32 %v637, %v638
    %vm640 = vcmp.lt.s32.totalorder %v621, 1
    %vm641 = vcmp.lt.s32.totalorder %v621, 2
    %vm642 = vcmp.lt.s32.totalorder %v621, 3
    %vm643 = vcmp.lt.s32.totalorder %v621, 4
    %v644 = vsel %vm640, %v624, %v627
    %v645 = vsel %vm643, %v633, 2102212464
    %v646 = vsel %vm642, %v630, %v645
    %v647 = vsel %vm641, %v644, %v646
    %v648 = vsel %vm640, %v627, %v630
    %v649 = vsel %vm643, %v636, 920167782
    %v650 = vsel %vm642, %v633, %v649
    %v651 = vsel %vm641, %v648, %v650
    %v652 = vsel %vm640, %v630, %v633
    %v653 = vsel %vm643, %v639, 1326507024
    %v654 = vsel %vm642, %v636, %v653
    %v655 = vsel %vm641, %v652, %v654
    %v656 = vshll.u32 %v616, 8
    %v657 = vand.u32 %v656, 65535
    %v658 = vshrl.u32 %v656, 16
    %v659 = vand.u32 %v655, 65535
    %v660 = vshrl.u32 %v655, 16
    %v661 = vmul.u32 %v657, %v659
    %v662 = vmul.u32 %v657, %v660
    %v663 = vmul.u32 %v658, %v659
    %v664 = vmul.u32 %v658, %v660
    %v665 = vshll.u32 %v662, 16
    %v666 = vshrl.u32 %v662, 16
    %v667 = vshll.u32 %v663, 16
    %v668 = vshrl.u32 %v663, 16
    %vm669 = vc.u32 %v661, %v665
    %v670 = vsel %vm669, 1, 0
    %v671 = vadd.s32 %v661, %v665
    %v672 = vadd.s32 %v664, %v670
    %vm673 = vc.u32 %v671, %v667
    %v674 = vsel %vm673, 1, 0
    %v675 = vadd.s32 %v671, %v667
    %v676 = vadd.s32 %v672, %v674
    %v677 = vadd.s32 %v676, %v666
    %v678 = vadd.s32 %v677, %v668
    %v679 = vand.u32 %v656, 65535
    %v680 = vshrl.u32 %v656, 16
    %v681 = vand.u32 %v651, 65535
    %v682 = vshrl.u32 %v651, 16
    %v683 = vmul.u32 %v679, %v681
    %v684 = vmul.u32 %v679, %v682
    %v685 = vmul.u32 %v680, %v681
    %v686 = vmul.u32 %v680, %v682
    %v687 = vshll.u32 %v684, 16
    %v688 = vshrl.u32 %v684, 16
    %v689 = vshll.u32 %v685, 16
    %v690 = vshrl.u32 %v685, 16
    %vm691 = vc.u32 %v683, %v687
    %v692 = vsel %vm691, 1, 0
    %v693 = vadd.s32 %v683, %v687
    %v694 = vadd.s32 %v686, %v692
    %vm695 = vc.u32 %v693, %v689
    %v696 = vsel %vm695, 1, 0
    %v697 = vadd.s32 %v693, %v689
    %v698 = vadd.s32 %v694, %v696
    %v699 = vadd.s32 %v698, %v688
    %v700 = vadd.s32 %v699, %v690
    %v701 = vmul.u32 %v656, %v647
    %v702 = vadd.s32 %v678, %v697
    %vm703 = vc.u32 %v678, %v697
    %v704 = vadd.s32 %v700, 1
    %v705 = vsel %vm703, %v704, %v700
    %v706 = vadd.s32 %v701, %v705
    %v707 = vadd.s32 %v706, 536870912
    %v708 = vshrl.u32 %v707, 30
    %v709 = vshll.u32 %v708, 30
    %v710 = vsub.s32 %v706, %v709
    %vm711 = vcmp.lt.s32.totalorder %v710, 0
    %v712 = vsub.s32 0, %v710
    %v713 = vsel %vm711, %v712, %v710
    %v714 = vclz %v713
    %v715 = vsub.s32 %v714, 2
    %vm716 = vcmp.gt.s32.totalorder 0, %v715
    %v717 = vsel %vm716, 0, %v715
    %v718 = vsub.s32 32, %v717
    %v719 = vshll.u32 %v710, %v717
    %v720 = vshrl.u32 %v702, %v718
    %v721 = vor.u32 %v719, %v720
    %v722 = vsub.s32 4294967266, %v717
    %v723 = vadd.s32 %v722, 127
    %v724 = vshll.u32 %v723, 23
    %v725 = vor.u32 4788187, %v724
    %v726 = vand.u32 2147483647, %v725
    %v728 = vcvt.s32.f32 %v721
    %v729 = vmul.f32 %v728, %v726
    %v730 = vxor.u32 %v729, 2147483648
    %v731 = vsel %vm610, %v730, %v729
    %v732 = vsub.s32 4, %v708
    %v733 = vsel %vm610, %v732, %v708
    %v734 = vsel %vm609, %v142, %v731
    %v735 = vsel %vm609, 0, %v733
    %v736 = vmul.f32 %v734, %v734
    %v737 = vmul.f32 %v736, -0.001358992
    %v738 = vadd.f32 %v737, 0.041655596
    %v739 = vmul.f32 %v736, %v738
    %v740 = vadd.f32 %v739, -0.4999988
    %v741 = vmul.f32 %v736, %v740
    %v742 = vadd.f32 1.0, %v741
    %v743 = vmul.f32 %v734, %v734
    %v744 = vmul.f32 %v743, -0.00019511016
    %v745 = vadd.f32 %v744, 0.008332121
    %v746 = vmul.f32 %v743, %v745
    %v747 = vadd.f32 %v746, -0.16666654
    %v748 = vmul.f32 %v743, %v747
    %v749 = vadd.f32 %v748, 1.0
    %v750 = vmul.f32 %v749, %v734
    %vm751 = vweird.f32 %v142
    %v752 = vadd.s32 %v735, 3
    %v753 = vand.u32 %v752, 3
    %vm754 = vcmp.lt.s32.totalorder %v753, 2
    %vm755 = vcmp.eq.s32.totalorder %v753, 0
    %v756 = vxor.u32 %v750, 2147483648
    %v757 = vsel %vm755, %v742, %v756
    %vm758 = vcmp.eq.s32.totalorder %v753, 2
    %v759 = vxor.u32 %v742, 2147483648
    %v760 = vsel %vm758, %v759, %v750
    %v761 = vsel %vm754, %v757, %v760
    %v762 = vsel %vm751, nan, %v761
    %v763 = vmul.f32 %v128, %v607
    %v764 = vmul.f32 %v140, %v762
    %v765 = vmul.f32 %v451, 0.1
    %v766 = vmul.f32 %v452, 0.1
    %v767 = vmul.f32 %v763, 0.1
    %v768 = vmul.f32 %v764, 0.1
    %v769 = vld [vmem:[#allocation3] sm:$0xff]
    %v770 = vld [vmem:[#allocation3 + $0x8] sm:$0xff]
    %v771 = vld [vmem:[#allocation3 + $0x10] sm:$0xff]
    %v772 = vld [vmem:[#allocation3 + $0x18] sm:$0xff]
    %v773 = vadd.f32 %v769, %v765
    %v774 = vadd.f32 %v770, %v766
    %v775 = vadd.f32 %v771, %v767
    %v776 = vadd.f32 %v772, %v768
    %777 = vst [vmem:[#allocation6] sm:$0xff] %v773
    %778 = vst [vmem:[#allocation6 + $0x8] sm:$0xff] %v774
    %779 = vst [vmem:[#allocation6 + $0x10] sm:$0xff] %v775
    %780 = vst [vmem:[#allocation6 + $0x18] sm:$0xff] %v776
    // Predicated region
    $region14: #{tpu_custom_call.1} parent=1 // pred_check
      _
    $region15: #{tpu_custom_call.1} parent=1 // pred_check_branch
      %782 = sbr.rel (0) target = $region17
    $region16: #{tpu_custom_call.1} parent=1 // pred_region
      %784 = vsyncadd [#allocation5], 0
      %s786 = sshll.u32 [#allocation6], 4
      %s787 = int_to_ptr.vmem [resolvable:$true] %s786
      %s788 = sshll.u32 %s2, 4
      %s789 = int_to_ptr.hbm [resolvable:$true] %s788
      %791 = dma.vmem_to_hbm [thread:$0]  %s787, 512, %s789, [#allocation5]
    $region17: #{tpu_custom_call.1} parent=1 // pred_fallthru
      _
    // Predicated region
    $region18: #{tpu_custom_call.1} parent=1 // pred_check
      _
    $region19: #{tpu_custom_call.1} parent=1 // pred_check_branch
      %793 = sbr.rel (0) target = $region21
    $region20: #{tpu_custom_call.1} parent=1 // pred_region
      %795 = dma.done [#allocation5], 512
    $region21: #{tpu_custom_call.1} parent=1 // pred_fallthru
      _
    %796 = vsyncpa [#allocation4], 1
    %797 = vsyncpa [#allocation5], 1

</llo_original>
